<compile_context>
chip_gen: v7x
topology: tpu7x:2x2x1
jax: 0.10.0
libtpu: 0.0.40
codegen_flags: <defaults>
</compile_context>

<pallas_src>
import math

import jax
import jax.numpy as jnp
from jax.experimental import pallas as pl
from jax.experimental.pallas import tpu as pltpu


def _sublane(dtype) -> int:
    return {4: 8, 2: 16, 1: 32}.get(jnp.dtype(dtype).itemsize, 8)


def _add_pe_kernel(x_ref, pe_ref, o_ref):
    # x_ref / o_ref: (bb, tr, cols) tiles; pe_ref: (tr, cols) tile shared by the
    # whole batch block (broadcast over the leading, un-tiled dim is cheap VPU work).
    x = x_ref[...]
    pe = pe_ref[...].astype(x.dtype)
    o_ref[...] = (x + pe[None, :, :]).astype(o_ref.dtype)


def positional_encoding_forward(
    x: jnp.ndarray,
    pe_packed: jnp.ndarray,
    *,
    target_tile_bytes: int = 4 * 1024 * 1024,
) -> jnp.ndarray:
    """x: (B, S, D); pe_packed: (rows_full, cols) lane-dense packing of the
    (max_len, D) positional-encoding table (row-major flatten, zero-padded to a
    multiple of cols). Returns x + pe[:S, :] broadcast over batch."""
    B, S, D = x.shape
    rows_full, cols = pe_packed.shape
    P = S * D
    rows_x = pl.cdiv(P, cols)
    if rows_x > rows_full:
        raise ValueError("sequence length exceeds the positional-encoding table")

    # Lane-dense flat view of the (S, D) plane; pad so stores are never masked.
    pad = rows_x * cols - P
    x_flat = x.reshape(B, P)
    if pad:
        x_flat = jnp.pad(x_flat, ((0, 0), (0, pad)))
    x2 = x_flat.reshape(B, rows_x, cols)

    itemsize = jnp.dtype(x.dtype).itemsize
    sub = max(_sublane(x.dtype), _sublane(pe_packed.dtype))
    row_bytes = cols * itemsize

    if rows_x < sub:
        # Tiny plane: one (unaligned) row-tile. Slice pe to full extent so every
        # BlockSpec block shape equals its array dims (keeps Mosaic's (8,128) rule
        # satisfied); the prefix slice is negligible at this size.
        tr = rows_x
        pe_use = pe_packed if rows_full == rows_x else pe_packed[:rows_x, :]
    else:
        # Sublane-aligned row-tile of ~target_tile_bytes; index straight into the
        # full packed table (no per-call pe slice / cast pass over HBM).
        tr = min(rows_x, max(sub, target_tile_bytes // row_bytes))
        tr = (tr // sub) * sub
        pe_use = pe_packed

    # Fold batch elements into the tile until it reaches ~target_tile_bytes so the
    # per-step DMA amortizes the grid-step overhead (matters when S*D is small).
    tile_bytes = max(1, tr * row_bytes)
    bb = max(1, min(B, target_tile_bytes // tile_bytes))

    n_r = pl.cdiv(rows_x, tr)
    n_b = pl.cdiv(B, bb)
    # Batch innermost: consecutive steps reuse the same pe block (no re-DMA).
    grid = (n_r, n_b)

    out2 = pl.pallas_call(
        _add_pe_kernel,
        out_shape=jax.ShapeDtypeStruct((B, rows_x, cols), x.dtype),
        grid_spec=pltpu.PrefetchScalarGridSpec(
            num_scalar_prefetch=0,
            grid=grid,
            in_specs=[
                pl.BlockSpec((bb, tr, cols), lambda r, b: (b, r, 0)),
                # TODO(synk): pipeline_mode=pl.Buffered(1) on pe (it only changes
                # once every n_b steps) would free one tile of VMEM on v7x.
                pl.BlockSpec((tr, cols), lambda r, b: (r, 0)),
            ],
            out_specs=pl.BlockSpec((bb, tr, cols), lambda r, b: (b, r, 0)),
        ),
        compiler_params=pltpu.CompilerParams(
            # Rows may shard across TensorCores (v7x); batch stays "arbitrary" so
            # scheduling can never break the pe-resident (no re-DMA) trick.
            dimension_semantics=("parallel", "arbitrary"),
            vmem_limit_bytes=32 * 1024 * 1024,
        ),
        # TODO(synk): input_output_aliases={0: 0} (+ donating x at the jit boundary)
        # would drop the extra output allocation; left off so the un-donated eager
        # path never pays a defensive copy.
    )(x2, pe_use)

    if pad:
        return out2.reshape(B, rows_x * cols)[:, :P].reshape(B, S, D)
    return out2.reshape(B, S, D)


class PositionalEncoding:
    """JAX/Pallas equivalent of the PyTorch PositionalEncoding module."""

    def __init__(self, d_model: int, max_len: int = 5000, dtype=jnp.float32):
        self.d_model = d_model
        self.max_len = max_len
        position = jnp.arange(0, max_len, dtype=jnp.float32)[:, None]       # (max_len, 1)
        div_term = jnp.exp(
            jnp.arange(0, d_model, 2, dtype=jnp.float32)
            * (-math.log(10000.0) / d_model)
        )                                                                    # (d_model//2,)
        angles = position * div_term                                         # (max_len, d_model//2)
        pe = jnp.zeros((max_len, d_model), dtype=jnp.float32)
        pe = pe.at[:, 0::2].set(jnp.sin(angles))
        pe = pe.at[:, 1::2].set(jnp.cos(angles))
        pe = pe.astype(dtype)                                                # model dtype, cast ONCE
        self.pe = pe[None]                                                   # (1, max_len, d_model): mirrors register_buffer

        # Lane-dense packing, done ONCE at init: row-major flatten of (max_len, D),
        # zero-padded to a multiple of cols (>= 128 lanes).
        cols = d_model if d_model % 128 == 0 else 128
        flat = pe.reshape(-1)
        pe_pad = (-flat.shape[0]) % cols
        if pe_pad:
            flat = jnp.concatenate([flat, jnp.zeros((pe_pad,), dtype=dtype)])
        self.pe_packed = flat.reshape(-1, cols)                              # (rows_full, cols)

    def __call__(self, x: jnp.ndarray) -> jnp.ndarray:
        assert x.ndim == 3 and x.shape[2] == self.d_model
        assert x.shape[1] <= self.max_len
        return positional_encoding_forward(x, self.pe_packed)


if __name__ == "__main__":
    key = jax.random.PRNGKey(0)

    # Primary small demo: batch=2, seq=8, d_model=32 (tiny plane -> batch-folded tile).
    B, S, D = 2, 8, 32
    module = PositionalEncoding(D, max_len=64)
    x = jax.random.normal(key, (B, S, D), dtype=jnp.float32)
    out = jax.block_until_ready(module(x))
    ref = x + module.pe[:, :S, :]
    assert out.shape == (B, S, D)
    assert jnp.allclose(out, ref, atol=1e-6, rtol=1e-6)

    # bf16 path: pe stored in bf16 at init, no per-call cast pass.
    module_bf16 = PositionalEncoding(D, max_len=64, dtype=jnp.bfloat16)
    xb = x.astype(jnp.bfloat16)
    outb = jax.block_until_ready(module_bf16(xb))
    refb = xb + module_bf16.pe[:, :S, :]
    assert jnp.allclose(
        outb.astype(jnp.float32), refb.astype(jnp.float32), atol=1e-2, rtol=1e-2
    )

    # Aligned multi-row-tile path (tr multiple of 8, full packed pe indexed by grid).
    B2, S2, D2 = 3, 24, 48
    module2 = PositionalEncoding(D2, max_len=128)
    x2 = jax.random.normal(jax.random.PRNGKey(1), (B2, S2, D2), dtype=jnp.float32)
    out2 = jax.block_until_ready(module2(x2))
    ref2 = x2 + module2.pe[:, :S2, :]
    assert jnp.allclose(out2, ref2, atol=1e-6, rtol=1e-6)

    # Odd S*D path (not a multiple of 128): wrapper pad keeps stores lane-dense.
    B3, S3, D3 = 2, 5, 40
    module3 = PositionalEncoding(D3, max_len=32)
    x3 = jax.random.normal(jax.random.PRNGKey(2), (B3, S3, D3), dtype=jnp.float32)
    out3 = jax.block_until_ready(module3(x3))
    ref3 = x3 + module3.pe[:, :S3, :]
    assert jnp.allclose(out3, ref3, atol=1e-6, rtol=1e-6)

    print("KERNEL_OK")
</pallas_src>

<mosaic_0001>
module attributes {stable_mosaic.version = 11 : i64} {
  func.func @_add_pe_kernel(%arg0: i32, %arg1: i32, %arg2: memref<2x2x128xf32, #tpu.memory_space<vmem>>, %arg3: memref<2x128xf32, #tpu.memory_space<vmem>>, %arg4: memref<2x2x128xf32, #tpu.memory_space<vmem>>) attributes {dimension_semantics = [#tpu.dimension_semantics<parallel>, #tpu.dimension_semantics<arbitrary>], iteration_bounds = array<i64: 1, 1>, scalar_prefetch = 0 : i64, scratch_operands = 0 : i64, tpu.core_type = #tpu.core_type<tc>, window_params = [{transform_indices = @transform_0, window_bounds = array<i64: 2, 2, 128>}, {transform_indices = @transform_1, window_bounds = array<i64: 2, 128>}, {transform_indices = @transform_2, window_bounds = array<i64: 2, 2, 128>}]} {
    %c0 = arith.constant 0 : index
    %c0_0 = arith.constant 0 : index
    %c0_1 = arith.constant 0 : index
    %0 = vector.load %arg2[%c0, %c0_0, %c0_1] : memref<2x2x128xf32, #tpu.memory_space<vmem>>, vector<2x2x128xf32>
    %c0_2 = arith.constant 0 : index
    %c0_3 = arith.constant 0 : index
    %1 = vector.load %arg3[%c0_2, %c0_3] : memref<2x128xf32, #tpu.memory_space<vmem>>, vector<2x128xf32>
    %2 = vector.shape_cast %1 : vector<2x128xf32> to vector<1x2x128xf32>
    %3 = vector.broadcast %2 : vector<1x2x128xf32> to vector<2x2x128xf32>
    %4 = arith.addf %0, %3 : vector<2x2x128xf32>
    %c0_4 = arith.constant 0 : index
    %c0_5 = arith.constant 0 : index
    %c0_6 = arith.constant 0 : index
    %5 = vector.load %arg4[%c0_4, %c0_5, %c0_6] : memref<2x2x128xf32, #tpu.memory_space<vmem>>, vector<2x2x128xf32>
    tpu.vector_store %arg4[%c0_4, %c0_5, %c0_6], %4 {strides = array<i32>} : memref<2x2x128xf32, #tpu.memory_space<vmem>>, vector<2x2x128xf32>,
    return
  }
  func.func @transform_0(%arg0: i32, %arg1: i32) -> (i32, i32, i32) {
    %c0_i32 = arith.constant 0 : i32
    %c0_i32_0 = arith.constant 0 : i32
    return %arg1, %arg0, %c0_i32 : i32, i32, i32
  }
  func.func @transform_1(%arg0: i32, %arg1: i32) -> (i32, i32) {
    %c0_i32 = arith.constant 0 : i32
    %c0_i32_0 = arith.constant 0 : i32
    return %arg0, %c0_i32 : i32, i32
  }
  func.func @transform_2(%arg0: i32, %arg1: i32) -> (i32, i32, i32) {
    %c0_i32 = arith.constant 0 : i32
    %c0_i32_0 = arith.constant 0 : i32
    return %arg1, %arg0, %c0_i32 : i32, i32, i32
  }
}

</mosaic_0001>

<llo_original>
// kernel: tpu_custom_call.1
$region0: #{tpu_custom_call.1}
  #allocation0 [shape = 'u32[]', space=smem, size = 0x4, offset = 0x4, fixed_abs, tag = 'smem constant byte address 0x4 - core index']
  #allocation1 [shape = 'u32[144,128]{1,0:T(1,128)}', space=vmem, size = 0x12000, scoped, tag = 'internal scratch']
  %s0 = inlined_call_operand.hbm [shape: f32[2,2,128], index: 0, kind: input, shape index: {}]
  %s1 = inlined_call_operand.vmem [shape: f32[2,128], index: 1, kind: input, shape index: {}]
  %s2 = inlined_call_operand.hbm [shape: f32[2,2,128], index: 2, kind: output, shape index: {}]
  %s3 = sld [smem:[#allocation0]]
  $region22: #{tpu_custom_call.1} parent=0
    _
  %s5 = ssub.s32 1, %s3
  %s6 = scalar_select 0, %s5, %s3
  $region1: #{tpu_custom_call.1} parent=0
    #allocation2 [shape = 'u8[2048]{0}', space=vmem, size = 0x800, scoped, tag = 'input window, operand 0, single buffered']
    #allocation3 [shape = 's32[1]{0}', space=sflag, size = 0x4, scoped, tag = 'scoped memory for tpu_custom_call.1']
    #allocation4 [shape = 's32[1]{0}', space=sflag, size = 0x4, scoped, tag = 'scoped memory for tpu_custom_call.1']
    #allocation5 [shape = 'u8[2048]{0}', space=vmem, size = 0x800, scoped, tag = 'output window, operand 0, single buffered']
    %7 = vsyncpa [#allocation3], 0
    %8 = vsyncpa [#allocation4], 0
    // Predicated region
    $region2: #{tpu_custom_call.1} parent=1 // pred_check
      _
    $region3: #{tpu_custom_call.1} parent=1 // pred_check_branch
      %10 = sbr.rel (0) target = $region5
    $region4: #{tpu_custom_call.1} parent=1 // pred_region
      %s12 = ssub.s32 64, 64
      %13 = vsyncadd [#allocation3], %s12
      %s14 = sshll.u32 [#allocation2], 4
      %s15 = int_to_ptr.vmem [resolvable:$true] %s14
      %20 = dma.hbm_to_vmem [thread:$0]  %s0, 64, %s15, [#allocation3], 32, 32, 2
    $region5: #{tpu_custom_call.1} parent=1 // pred_fallthru
      _
    // Predicated region
    $region6: #{tpu_custom_call.1} parent=1 // pred_check
      _
    $region7: #{tpu_custom_call.1} parent=1 // pred_check_branch
      %22 = sbr.rel (0) target = $region9
    $region8: #{tpu_custom_call.1} parent=1 // pred_region
      _
    $region9: #{tpu_custom_call.1} parent=1 // pred_fallthru
      _
    // Predicated region
    $region10: #{tpu_custom_call.1} parent=1 // pred_check
      _
    $region11: #{tpu_custom_call.1} parent=1 // pred_check_branch
      %24 = sbr.rel (0) target = $region13
    $region12: #{tpu_custom_call.1} parent=1 // pred_region
      %25 = dma.done [#allocation3], 64
    $region13: #{tpu_custom_call.1} parent=1 // pred_fallthru
      _
    %v26 = vld [vmem:[#allocation2] sm:$0x3]
    %v27 = vld [vmem:[#allocation2 + $0x2] sm:$0x3]
    %v28 = vld [vmem:[%s1] sm:$0x3]
    %v29 = vadd.f32 %v26, %v28
    %v30 = vadd.f32 %v27, %v28
    %31 = vst [vmem:[#allocation5] sm:$0x3] %v29
    %32 = vst [vmem:[#allocation5 + $0x2] sm:$0x3] %v30
    // Predicated region
    $region14: #{tpu_custom_call.1} parent=1 // pred_check
      _
    $region15: #{tpu_custom_call.1} parent=1 // pred_check_branch
      %34 = sbr.rel (0) target = $region17
    $region16: #{tpu_custom_call.1} parent=1 // pred_region
      %s36 = ssub.s32 64, 64
      %37 = vsyncadd [#allocation4], %s36
      %s38 = sshll.u32 [#allocation5], 4
      %s39 = int_to_ptr.vmem [resolvable:$true] %s38
      %44 = dma.vmem_to_hbm [thread:$0]  %s39, 64, %s2, [#allocation4], 32, 32, 2
    $region17: #{tpu_custom_call.1} parent=1 // pred_fallthru
      _
    // Predicated region
    $region18: #{tpu_custom_call.1} parent=1 // pred_check
      _
    $region19: #{tpu_custom_call.1} parent=1 // pred_check_branch
      %46 = sbr.rel (0) target = $region21
    $region20: #{tpu_custom_call.1} parent=1 // pred_region
      %47 = dma.done [#allocation4], 64
    $region21: #{tpu_custom_call.1} parent=1 // pred_fallthru
      _
    %48 = vsyncpa [#allocation3], 1
    %49 = vsyncpa [#allocation4], 1

</llo_original>
